<compile_context>
chip_gen: v7x
topology: tpu7x:2x2x1
jax: 0.10.0
libtpu: 0.0.40
codegen_flags: <defaults>
</compile_context>

<pallas_src>
import functools

import jax
import jax.numpy as jnp
from jax.experimental import pallas as pl
from jax.experimental.pallas import tpu as pltpu


def _round_up(n, m):
    return ((n + m - 1) // m) * m


def _masked_net_kernel(x_ref, w1m_ref, b1_ref, w2_ref, b2_ref, w3_ref, b3_ref,
                       w4h_ref, w4c_ref, o_ref, *, in_nodes):
    """One batch tile (batch on lanes): 3 MXU matmuls + tanh; final layer = VPU mul + sublane reduce."""
    wdt = w1m_ref.dtype                              # matmul input dtype (bf16 or f32)

    # Feature split of the single x^T load: static sublane slices (free).
    x1 = x_ref[:in_nodes, :]                          # (In_Nodes, TB) genomic features
    x2 = x_ref[in_nodes:, :].astype(jnp.float32)      # (clinic,   TB) clinical covariates

    # Layer 1 (pathway mask already fused into w1m in prepare_params).
    h1 = jnp.tanh(
        jnp.dot(w1m_ref[...], x1, preferred_element_type=jnp.float32) + b1_ref[...])
    h2 = jnp.tanh(
        jnp.dot(w2_ref[...], h1.astype(wdt), preferred_element_type=jnp.float32) + b2_ref[...])
    h3 = jnp.tanh(
        jnp.dot(w3_ref[...], h2.astype(wdt), preferred_element_type=jnp.float32) + b3_ref[...])

    # W4 @ concat(h3, x2)  ==  sum_sublane(h3 * w4h) + sum_sublane(x2 * w4c)   (exact split of W4).
    pred = (jnp.sum(h3 * w4h_ref[...], axis=0, keepdims=True)
            + jnp.sum(x2 * w4c_ref[...], axis=0, keepdims=True))          # (1, TB), lane-dense
    o_ref[...] = pred.astype(o_ref.dtype)


def prepare_params(params, *, use_bf16=True):
    """One-time parameter preprocessing (hoisted out of the per-call path).

    params: dict with mask, w1, b1, w2, b2, w3, b3, w4 in PyTorch (out, in) layout.
    The transposed (batch-on-lanes) kernel consumes weights directly in (out, in)
    layout; the mask is fused into w1 and W4 is split into its h3 / clinical columns.
    """
    wdt = jnp.bfloat16 if use_bf16 else jnp.float32
    w1m = (params["w1"] * params["mask"]).astype(wdt)      # (Pathway, In_Nodes)
    w2 = params["w2"].astype(wdt)                           # (H1, Pathway)
    w3 = params["w3"].astype(wdt)                           # (H2, H1)
    h2_dim = w3.shape[0]
    w4_row = params["w4"].reshape(-1).astype(jnp.float32)   # (H2 + clinic,)
    return dict(
        w1m=w1m,
        b1=params["b1"].reshape(-1, 1).astype(jnp.float32),
        w2=w2,
        b2=params["b2"].reshape(-1, 1).astype(jnp.float32),
        w3=w3,
        b3=params["b3"].reshape(-1, 1).astype(jnp.float32),
        w4h=w4_row[:h2_dim].reshape(-1, 1),   # (H2, 1)     dotted with h3 via VPU + sublane reduce
        w4c=w4_row[h2_dim:].reshape(-1, 1),   # (clinic, 1) dotted with x2 via VPU + sublane reduce
    )


def _choose_tile(batch, block_b):
    """Lane-axis batch tile: multiple of 128, capped by block_b; keep >=4 grid steps for large B."""
    tb = _round_up(min(block_b, max(batch, 1)), 128)
    if batch >= 4 * 1024:
        # v7x megacore balance: prefer >= 4 grid steps so both TensorCores get work,
        # but never shrink below 1024 rows (per-step overhead dominates smaller tiles).
        tb = min(tb, max(1024, _round_up(-(-batch // 4), 128)))
    return tb


@functools.partial(jax.jit, static_argnames=("clinic_nodes", "block_b"))
def masked_net_forward(x, prepped, clinic_nodes, *, block_b=8192):
    """x: (B, In_Nodes + clinic_nodes); prepped: output of prepare_params. Returns (B, 1) f32."""
    if clinic_nodes < 1:
        # TODO(synk): clinic_nodes == 0 branch (sc4 on h3 alone) is not implemented.
        raise NotImplementedError("masked_net_forward requires clinic_nodes >= 1")
    B, n_col = x.shape
    in_nodes = n_col - clinic_nodes

    wdt = prepped["w1m"].dtype
    tb = _choose_tile(B, block_b)
    b_pad = _round_up(B, tb)
    n_steps = b_pad // tb

    # Feature-major presentation of x: transpose + storage-dtype cast + batch pad fuse
    # into one XLA pass over x; inside the kernel every DMA row, vreg and store is
    # lane-dense.  Padded batch columns flow through tanh and are sliced off below.
    x_t = jnp.pad(x.T.astype(wdt), ((0, 0), (0, b_pad - B)))

    w1m, b1 = prepped["w1m"], prepped["b1"]
    w2, b2 = prepped["w2"], prepped["b2"]
    w3, b3 = prepped["w3"], prepped["b3"]
    w4h, w4c = prepped["w4h"], prepped["w4c"]

    def const_spec(arr):
        # Weight / bias: same block every grid step -> VMEM-resident, single DMA.
        return pl.BlockSpec(arr.shape, lambda i: (0, 0))

    def x_spec():
        idx = lambda i: (0, i)
        if n_steps >= 3:
            # Per-step compute is tiny; a 3rd buffer (~tb * n_col bytes) hides exposed DMA latency.
            try:
                return pl.BlockSpec((n_col, tb), idx, pipeline_mode=pl.Buffered(3))
            except TypeError:   # older jax without pipeline_mode on BlockSpec
                pass
        return pl.BlockSpec((n_col, tb), idx)

    kernel = functools.partial(_masked_net_kernel, in_nodes=in_nodes)

    out = pl.pallas_call(
        kernel,
        out_shape=jax.ShapeDtypeStruct((1, b_pad), jnp.float32),
        grid=(n_steps,),
        in_specs=[
            x_spec(),                                  # x^T tile, pipelined over batch (lanes)
            const_spec(w1m), const_spec(b1),
            const_spec(w2), const_spec(b2),
            const_spec(w3), const_spec(b3),
            const_spec(w4h), const_spec(w4c),
        ],
        out_specs=pl.BlockSpec((1, tb), lambda i: (0, i)),   # lane-dense output row
        compiler_params=pltpu.CompilerParams(
            dimension_semantics=("parallel",)),        # megacore-shard batch steps on v7x
    )(x_t, w1m, b1, w2, b2, w3, b3, w4h, w4c)

    return out[0, :B].reshape(B, 1)


def _reference_forward(x, params, clinic_nodes):
    n_col = x.shape[1]
    x1 = x[:, : n_col - clinic_nodes]
    x2 = x[:, n_col - clinic_nodes:]
    h1 = jnp.tanh(x1 @ (params["w1"] * params["mask"]).T + params["b1"])
    h2 = jnp.tanh(h1 @ params["w2"].T + params["b2"])
    h3 = jnp.tanh(h2 @ params["w3"].T + params["b3"])
    xc = jnp.concatenate([h3, x2], axis=1)
    return xc @ params["w4"].T


if __name__ == "__main__":
    # Small shapes consistent with the module's paramHash.
    batch = 8
    in_nodes = 32          # paramHash['In_Nodes']
    pathway_nodes = 16     # paramHash['Pathway_Nodes']
    h1_nodes = 16          # paramHash['net_postPath_1_nodes']
    h2_nodes = 8           # paramHash['net_postPath_2_nodes']
    clinic_nodes = 4       # paramHash['net_clinic_nodes']

    key = jax.random.PRNGKey(0)
    ks = jax.random.split(key, 10)

    # Deterministic synthetic parameters (PyTorch nn.Linear layout: (out, in)).
    params = {
        "w1": jax.random.normal(ks[0], (pathway_nodes, in_nodes), jnp.float32) * 0.1,
        "b1": jax.random.normal(ks[1], (pathway_nodes,), jnp.float32) * 0.1,
        "w2": jax.random.normal(ks[2], (h1_nodes, pathway_nodes), jnp.float32) * 0.1,
        "b2": jax.random.normal(ks[3], (h1_nodes,), jnp.float32) * 0.1,
        "w3": jax.random.normal(ks[4], (h2_nodes, h1_nodes), jnp.float32) * 0.1,
        "b3": jax.random.normal(ks[5], (h2_nodes,), jnp.float32) * 0.1,
        "w4": jax.random.normal(ks[6], (1, h2_nodes + clinic_nodes), jnp.float32) * 0.1,
        # Pathway_Mask: deterministic binary sparsity pattern, shape (Pathway_Nodes, In_Nodes).
        "mask": (jax.random.uniform(ks[7], (pathway_nodes, in_nodes)) > 0.5
                 ).astype(jnp.float32),
    }

    # --- f32 storage path, small batch (single grid step) ---
    x_small = jax.random.normal(ks[8], (batch, in_nodes + clinic_nodes), jnp.float32)
    prepped_f32 = prepare_params(params, use_bf16=False)
    out = jax.block_until_ready(masked_net_forward(x_small, prepped_f32, clinic_nodes))
    ref = _reference_forward(x_small, params, clinic_nodes)
    assert out.shape == (batch, 1)
    assert jnp.allclose(out, ref, atol=1e-4, rtol=1e-4), "f32 small-batch mismatch"

    # --- f32 path, batch not divisible by the tile (exercises padding + 3-deep pipeline) ---
    big_b = 300
    x_big = jax.random.normal(ks[9], (big_b, in_nodes + clinic_nodes), jnp.float32)
    out_big = jax.block_until_ready(
        masked_net_forward(x_big, prepped_f32, clinic_nodes, block_b=128))
    ref_big = _reference_forward(x_big, params, clinic_nodes)
    assert out_big.shape == (big_b, 1)
    assert jnp.allclose(out_big, ref_big, atol=1e-4, rtol=1e-4), "f32 tiled mismatch"

    # --- default bf16 storage path (HBM-traffic optimization), f32 accumulate/elementwise ---
    prepped_bf16 = prepare_params(params)   # use_bf16=True is now the default
    out_bf16 = jax.block_until_ready(
        masked_net_forward(x_big, prepped_bf16, clinic_nodes, block_b=128))
    assert out_bf16.shape == (big_b, 1)
    assert float(jnp.max(jnp.abs(out_bf16 - ref_big))) < 5e-2, "bf16 path diverged"

    # --- default large-tile path (block_b=8192) on a modest batch ---
    out_def = jax.block_until_ready(masked_net_forward(x_big, prepped_f32, clinic_nodes))
    assert jnp.allclose(out_def, ref_big, atol=1e-4, rtol=1e-4), "default-tile mismatch"

    print("KERNEL_OK")
</pallas_src>

<mosaic_0001>
module attributes {stable_mosaic.version = 11 : i64} {
  func.func @_masked_net_kernel(%arg0: i32, %arg1: memref<36x128xf32, #tpu.memory_space<vmem>>, %arg2: memref<16x32xf32, #tpu.memory_space<vmem>>, %arg3: memref<16x1xf32, #tpu.memory_space<vmem>>, %arg4: memref<16x16xf32, #tpu.memory_space<vmem>>, %arg5: memref<16x1xf32, #tpu.memory_space<vmem>>, %arg6: memref<8x16xf32, #tpu.memory_space<vmem>>, %arg7: memref<8x1xf32, #tpu.memory_space<vmem>>, %arg8: memref<8x1xf32, #tpu.memory_space<vmem>>, %arg9: memref<4x1xf32, #tpu.memory_space<vmem>>, %arg10: memref<1x128xf32, #tpu.memory_space<vmem>>) attributes {dimension_semantics = [#tpu.dimension_semantics<parallel>], iteration_bounds = array<i64: 1>, scalar_prefetch = 0 : i64, scratch_operands = 0 : i64, tpu.core_type = #tpu.core_type<tc>, window_params = [{transform_indices = @transform_0, window_bounds = array<i64: 36, 128>}, {pipeline_mode = #tpu.pipeline_mode<synchronous>, transform_indices = @transform_1, window_bounds = array<i64: 16, 32>}, {pipeline_mode = #tpu.pipeline_mode<synchronous>, transform_indices = @transform_2, window_bounds = array<i64: 16, 1>}, {pipeline_mode = #tpu.pipeline_mode<synchronous>, transform_indices = @transform_3, window_bounds = array<i64: 16, 16>}, {pipeline_mode = #tpu.pipeline_mode<synchronous>, transform_indices = @transform_4, window_bounds = array<i64: 16, 1>}, {pipeline_mode = #tpu.pipeline_mode<synchronous>, transform_indices = @transform_5, window_bounds = array<i64: 8, 16>}, {pipeline_mode = #tpu.pipeline_mode<synchronous>, transform_indices = @transform_6, window_bounds = array<i64: 8, 1>}, {pipeline_mode = #tpu.pipeline_mode<synchronous>, transform_indices = @transform_7, window_bounds = array<i64: 8, 1>}, {pipeline_mode = #tpu.pipeline_mode<synchronous>, transform_indices = @transform_8, window_bounds = array<i64: 4, 1>}, {transform_indices = @transform_9, window_bounds = array<i64: 1, 128>}]} {
    %c0 = arith.constant 0 : index
    %c0_0 = arith.constant 0 : index
    %0 = vector.load %arg1[%c0, %c0_0] : memref<36x128xf32, #tpu.memory_space<vmem>>, vector<32x128xf32>
    %c32 = arith.constant 32 : index
    %c0_1 = arith.constant 0 : index
    %1 = vector.load %arg1[%c32, %c0_1] : memref<36x128xf32, #tpu.memory_space<vmem>>, vector<4x128xf32>
    %c0_2 = arith.constant 0 : index
    %c0_3 = arith.constant 0 : index
    %2 = vector.load %arg2[%c0_2, %c0_3] : memref<16x32xf32, #tpu.memory_space<vmem>>, vector<16x32xf32>
    %cst = arith.constant dense<0.000000e+00> : vector<16x128xf32>
    %3 = tpu.matmul %2, %0, %cst {dimension_numbers = #tpu.dot_dimension_numbers<[1], [0], [0], [1], [0, 0, 1, 1], [], []>} : vector<16x32xf32>, vector<32x128xf32>, vector<16x128xf32> -> vector<16x128xf32>
    %c0_4 = arith.constant 0 : index
    %c0_5 = arith.constant 0 : index
    %4 = vector.load %arg3[%c0_4, %c0_5] : memref<16x1xf32, #tpu.memory_space<vmem>>, vector<16x1xf32>
    %5 = vector.broadcast %4 : vector<16x1xf32> to vector<16x128xf32>
    %6 = arith.addf %3, %5 : vector<16x128xf32>
    %7 = math.tanh %6 : vector<16x128xf32>
    %c0_6 = arith.constant 0 : index
    %c0_7 = arith.constant 0 : index
    %8 = vector.load %arg4[%c0_6, %c0_7] : memref<16x16xf32, #tpu.memory_space<vmem>>, vector<16x16xf32>
    %cst_8 = arith.constant dense<0.000000e+00> : vector<16x128xf32>
    %9 = tpu.matmul %8, %7, %cst_8 {dimension_numbers = #tpu.dot_dimension_numbers<[1], [0], [0], [1], [0, 0, 1, 1], [], []>} : vector<16x16xf32>, vector<16x128xf32>, vector<16x128xf32> -> vector<16x128xf32>
    %c0_9 = arith.constant 0 : index
    %c0_10 = arith.constant 0 : index
    %10 = vector.load %arg5[%c0_9, %c0_10] : memref<16x1xf32, #tpu.memory_space<vmem>>, vector<16x1xf32>
    %11 = vector.broadcast %10 : vector<16x1xf32> to vector<16x128xf32>
    %12 = arith.addf %9, %11 : vector<16x128xf32>
    %13 = math.tanh %12 : vector<16x128xf32>
    %c0_11 = arith.constant 0 : index
    %c0_12 = arith.constant 0 : index
    %14 = vector.load %arg6[%c0_11, %c0_12] : memref<8x16xf32, #tpu.memory_space<vmem>>, vector<8x16xf32>
    %cst_13 = arith.constant dense<0.000000e+00> : vector<8x128xf32>
    %15 = tpu.matmul %14, %13, %cst_13 {dimension_numbers = #tpu.dot_dimension_numbers<[1], [0], [0], [1], [0, 0, 1, 1], [], []>} : vector<8x16xf32>, vector<16x128xf32>, vector<8x128xf32> -> vector<8x128xf32>
    %c0_14 = arith.constant 0 : index
    %c0_15 = arith.constant 0 : index
    %16 = vector.load %arg7[%c0_14, %c0_15] : memref<8x1xf32, #tpu.memory_space<vmem>>, vector<8x1xf32>
    %17 = vector.broadcast %16 : vector<8x1xf32> to vector<8x128xf32>
    %18 = arith.addf %15, %17 : vector<8x128xf32>
    %19 = math.tanh %18 : vector<8x128xf32>
    %c0_16 = arith.constant 0 : index
    %c0_17 = arith.constant 0 : index
    %20 = vector.load %arg8[%c0_16, %c0_17] : memref<8x1xf32, #tpu.memory_space<vmem>>, vector<8x1xf32>
    %21 = vector.broadcast %20 : vector<8x1xf32> to vector<8x128xf32>
    %22 = arith.mulf %19, %21 : vector<8x128xf32>
    %cst_18 = arith.constant dense<0.000000e+00> : vector<128xf32>
    %23 = vector.multi_reduction <add>, %22, %cst_18 [0] : vector<8x128xf32> to vector<128xf32>
    %24 = vector.shape_cast %23 : vector<128xf32> to vector<1x128xf32>
    %c0_19 = arith.constant 0 : index
    %c0_20 = arith.constant 0 : index
    %25 = vector.load %arg9[%c0_19, %c0_20] : memref<4x1xf32, #tpu.memory_space<vmem>>, vector<4x1xf32>
    %26 = vector.broadcast %25 : vector<4x1xf32> to vector<4x128xf32>
    %27 = arith.mulf %1, %26 : vector<4x128xf32>
    %cst_21 = arith.constant dense<0.000000e+00> : vector<128xf32>
    %28 = vector.multi_reduction <add>, %27, %cst_21 [0] : vector<4x128xf32> to vector<128xf32>
    %29 = vector.shape_cast %28 : vector<128xf32> to vector<1x128xf32>
    %30 = arith.addf %24, %29 : vector<1x128xf32>
    %c0_22 = arith.constant 0 : index
    %c0_23 = arith.constant 0 : index
    %31 = vector.load %arg10[%c0_22, %c0_23] : memref<1x128xf32, #tpu.memory_space<vmem>>, vector<1x128xf32>
    tpu.vector_store %arg10[%c0_22, %c0_23], %30 {strides = array<i32>} : memref<1x128xf32, #tpu.memory_space<vmem>>, vector<1x128xf32>,
    return
  }
  func.func @transform_0(%arg0: i32) -> (i32, i32) {
    %c0_i32 = arith.constant 0 : i32
    %c0_i32_0 = arith.constant 0 : i32
    return %c0_i32, %arg0 : i32, i32
  }
  func.func @transform_1(%arg0: i32) -> (i32, i32) {
    %c0_i32 = arith.constant 0 : i32
    %c0_i32_0 = arith.constant 0 : i32
    %c0_i32_1 = arith.constant 0 : i32
    return %c0_i32, %c0_i32_0 : i32, i32
  }
  func.func @transform_2(%arg0: i32) -> (i32, i32) {
    %c0_i32 = arith.constant 0 : i32
    %c0_i32_0 = arith.constant 0 : i32
    %c0_i32_1 = arith.constant 0 : i32
    return %c0_i32, %c0_i32_0 : i32, i32
  }
  func.func @transform_3(%arg0: i32) -> (i32, i32) {
    %c0_i32 = arith.constant 0 : i32
    %c0_i32_0 = arith.constant 0 : i32
    %c0_i32_1 = arith.constant 0 : i32
    return %c0_i32, %c0_i32_0 : i32, i32
  }
  func.func @transform_4(%arg0: i32) -> (i32, i32) {
    %c0_i32 = arith.constant 0 : i32
    %c0_i32_0 = arith.constant 0 : i32
    %c0_i32_1 = arith.constant 0 : i32
    return %c0_i32, %c0_i32_0 : i32, i32
  }
  func.func @transform_5(%arg0: i32) -> (i32, i32) {
    %c0_i32 = arith.constant 0 : i32
    %c0_i32_0 = arith.constant 0 : i32
    %c0_i32_1 = arith.constant 0 : i32
    return %c0_i32, %c0_i32_0 : i32, i32
  }
  func.func @transform_6(%arg0: i32) -> (i32, i32) {
    %c0_i32 = arith.constant 0 : i32
    %c0_i32_0 = arith.constant 0 : i32
    %c0_i32_1 = arith.constant 0 : i32
    return %c0_i32, %c0_i32_0 : i32, i32
  }
  func.func @transform_7(%arg0: i32) -> (i32, i32) {
    %c0_i32 = arith.constant 0 : i32
    %c0_i32_0 = arith.constant 0 : i32
    %c0_i32_1 = arith.constant 0 : i32
    return %c0_i32, %c0_i32_0 : i32, i32
  }
  func.func @transform_8(%arg0: i32) -> (i32, i32) {
    %c0_i32 = arith.constant 0 : i32
    %c0_i32_0 = arith.constant 0 : i32
    %c0_i32_1 = arith.constant 0 : i32
    return %c0_i32, %c0_i32_0 : i32, i32
  }
  func.func @transform_9(%arg0: i32) -> (i32, i32) {
    %c0_i32 = arith.constant 0 : i32
    %c0_i32_0 = arith.constant 0 : i32
    return %c0_i32, %arg0 : i32, i32
  }
}

</mosaic_0001>

<llo_original>
// kernel: masked_net_forward.1
$region0: #{masked_net_forward.1}
  #allocation0 [shape = 'u32[]', space=smem, size = 0x4, offset = 0x4, fixed_abs, tag = 'smem constant byte address 0x4 - core index']
  #allocation1 [shape = 'u32[144,128]{1,0:T(1,128)}', space=vmem, size = 0x12000, scoped, tag = 'internal scratch']
  %s0 = inlined_call_operand.vmem [shape: f32[36,128], index: 0, kind: input, shape index: {}]
  %s1 = inlined_call_operand.vmem [shape: f32[16,32], index: 1, kind: input, shape index: {}]
  %s2 = inlined_call_operand.vmem [shape: f32[16,1], index: 2, kind: input, shape index: {}]
  %s3 = inlined_call_operand.vmem [shape: f32[16,16], index: 3, kind: input, shape index: {}]
  %s4 = inlined_call_operand.vmem [shape: f32[16,1], index: 4, kind: input, shape index: {}]
  %s5 = inlined_call_operand.vmem [shape: f32[8,16], index: 5, kind: input, shape index: {}]
  %s6 = inlined_call_operand.vmem [shape: f32[8,1], index: 6, kind: input, shape index: {}]
  %s7 = inlined_call_operand.vmem [shape: f32[8,1], index: 7, kind: input, shape index: {}]
  %s8 = inlined_call_operand.vmem [shape: f32[4,1], index: 8, kind: input, shape index: {}]
  %s9 = inlined_call_operand.vmem [shape: f32[1,128], index: 9, kind: output, shape index: {}]
  %s10 = sld [smem:[#allocation0]]
  $region46: #{masked_net_forward.1} parent=0
    _
  %s12 = ssub.s32 1, %s10
  %s13 = scalar_select 0, %s12, %s10
  // Predicated region
  $region2: #{masked_net_forward.1} parent=0 // pred_check
    _
  $region3: #{masked_net_forward.1} parent=0 // pred_check_branch
    %15 = sbr.rel (0) target = $region5
  $region4: #{masked_net_forward.1} parent=0 // pred_region
    _
  $region5: #{masked_net_forward.1} parent=0 // pred_fallthru
    _
  // Predicated region
  $region6: #{masked_net_forward.1} parent=0 // pred_check
    _
  $region7: #{masked_net_forward.1} parent=0 // pred_check_branch
    %17 = sbr.rel (0) target = $region9
  $region8: #{masked_net_forward.1} parent=0 // pred_region
    _
  $region9: #{masked_net_forward.1} parent=0 // pred_fallthru
    _
  // Predicated region
  $region10: #{masked_net_forward.1} parent=0 // pred_check
    _
  $region11: #{masked_net_forward.1} parent=0 // pred_check_branch
    %19 = sbr.rel (0) target = $region13
  $region12: #{masked_net_forward.1} parent=0 // pred_region
    _
  $region13: #{masked_net_forward.1} parent=0 // pred_fallthru
    _
  // Predicated region
  $region14: #{masked_net_forward.1} parent=0 // pred_check
    _
  $region15: #{masked_net_forward.1} parent=0 // pred_check_branch
    %21 = sbr.rel (0) target = $region17
  $region16: #{masked_net_forward.1} parent=0 // pred_region
    _
  $region17: #{masked_net_forward.1} parent=0 // pred_fallthru
    _
  // Predicated region
  $region18: #{masked_net_forward.1} parent=0 // pred_check
    _
  $region19: #{masked_net_forward.1} parent=0 // pred_check_branch
    %23 = sbr.rel (0) target = $region21
  $region20: #{masked_net_forward.1} parent=0 // pred_region
    _
  $region21: #{masked_net_forward.1} parent=0 // pred_fallthru
    _
  // Predicated region
  $region22: #{masked_net_forward.1} parent=0 // pred_check
    _
  $region23: #{masked_net_forward.1} parent=0 // pred_check_branch
    %25 = sbr.rel (0) target = $region25
  $region24: #{masked_net_forward.1} parent=0 // pred_region
    _
  $region25: #{masked_net_forward.1} parent=0 // pred_fallthru
    _
  // Predicated region
  $region26: #{masked_net_forward.1} parent=0 // pred_check
    _
  $region27: #{masked_net_forward.1} parent=0 // pred_check_branch
    %27 = sbr.rel (0) target = $region29
  $region28: #{masked_net_forward.1} parent=0 // pred_region
    _
  $region29: #{masked_net_forward.1} parent=0 // pred_fallthru
    _
  // Predicated region
  $region30: #{masked_net_forward.1} parent=0 // pred_check
    _
  $region31: #{masked_net_forward.1} parent=0 // pred_check_branch
    %29 = sbr.rel (0) target = $region33
  $region32: #{masked_net_forward.1} parent=0 // pred_region
    _
  $region33: #{masked_net_forward.1} parent=0 // pred_fallthru
    _
  // Predicated region
  $region34: #{masked_net_forward.1} parent=0 // pred_check
    _
  $region35: #{masked_net_forward.1} parent=0 // pred_check_branch
    %31 = sbr.rel (0) target = $region37
  $region36: #{masked_net_forward.1} parent=0 // pred_region
    _
  $region37: #{masked_net_forward.1} parent=0 // pred_fallthru
    _
  %v32 = vld [vmem:[%s0] sm:$0xff]
  %v33 = vld [vmem:[%s0 + $0x8] sm:$0xff]
  %v34 = vld [vmem:[%s0 + $0x10] sm:$0xff]
  %v35 = vld [vmem:[%s0 + $0x18] sm:$0xff]
  %v36 = vld [vmem:[%s0 + $0x20] sm:$0xf]
  %v37 = vld [vmem:[%s1] sm:$0xff]
  %v38 = vld [vmem:[%s1 + $0x8] sm:$0xff]
  %v39 = vld [vmem:[%s2] sm:$0xff]
  %v40 = vld [vmem:[%s2 + $0x8] sm:$0xff]
  %42 = vset.pattern.permute.xlu0 0
  %43 = vperm.xlu0 %42, %v39
  %v44 = vpop.permute.xlu0 %43
  %47 = vset.pattern.permute.xlu0 0
  %48 = vperm.xlu0 %47, %v40
  %v49 = vpop.permute.xlu0 %48
  %vm51 = vcmask 261120
  %v53 = vsel %vm51, %v37, 0
  %v56 = vsel %vm51, %v38, 0
  %58 = vmatprep.subr.mxu0 0.0
  %59 = vmatpush1.msra.mxu0 %v32
  %60 = vmatprep.subr.mxu0 0.0
  %61 = vmatpush1.msra.mxu0 %v33
  %62 = vmatprep.subr.mxu0 0.0
  %63 = vmatpush1.msra.mxu0 %v34
  %64 = vmatprep.subr.mxu0 0.0
  %65 = vmatpush1.msra.mxu0 %v35
  %66 = vmatprep.subr.mxu0 0.0
  %67 = vmatpush1.msra.mxu0 0.0
  %68 = vmatprep.subr.mxu0 0.0
  %69 = vmatpush1.msra.mxu0 0.0
  %70 = vmatprep.subr.mxu0 0.0
  %71 = vmatpush1.msra.mxu0 0.0
  %72 = vmatprep.subr.mxu0 0.0
  %73 = vmatpush1.msra.mxu0 0.0
  %74 = vmatprep.subr.mxu0 0.0
  %75 = vmatpush1.msra.mxu0 0.0
  %76 = vmatprep.subr.mxu0 0.0
  %77 = vmatpush1.msra.mxu0 0.0
  %78 = vmatprep.subr.mxu0 0.0
  %79 = vmatpush1.msra.mxu0 0.0
  %80 = vmatprep.subr.mxu0 0.0
  %81 = vmatpush1.msra.mxu0 0.0
  %82 = vmatprep.subr.mxu0 0.0
  %83 = vmatpush1.msra.mxu0 0.0
  %84 = vmatprep.subr.mxu0 0.0
  %85 = vmatpush1.msra.mxu0 0.0
  %86 = vmatprep.subr.mxu0 0.0
  %87 = vmatpush1.msra.mxu0 0.0
  %88 = vmatprep.subr.mxu0 0.0
  %89 = vmatpush1.msra.mxu0 0.0
  %90 = vmatprep.subr.mxu0 0.0
  %91 = vmatpush1.msra.mxu0 0.0
  %92 = vmatprep.subr.mxu0 0.0
  %93 = vmatpush1.msra.mxu0 0.0
  %94 = vmatprep.subr.mxu0 0.0
  %95 = vmatpush1.msra.mxu0 0.0
  %96 = vmatprep.subr.mxu0 0.0
  %97 = vmatpush1.msra.mxu0 0.0
  %98 = vmatprep.subr.mxu0 0.0
  %99 = vmatpush1.msra.mxu0 0.0
  %100 = vmatprep.subr.mxu0 0.0
  %101 = vmatpush1.msra.mxu0 0.0
  %102 = vmatprep.subr.mxu0 0.0
  %103 = vmatpush1.msra.mxu0 0.0
  %104 = vmatprep.subr.mxu0 0.0
  %105 = vmatpush1.msra.mxu0 0.0
  %106 = vmatprep.subr.mxu0 0.0
  %107 = vmatpush1.msra.mxu0 0.0
  %108 = vmatprep.subr.mxu0 0.0
  %109 = vmatpush1.msra.mxu0 0.0
  %110 = vmatprep.subr.mxu0 0.0
  %111 = vmatpush1.msra.mxu0 0.0
  %112 = vmatprep.subr.mxu0 0.0
  %113 = vmatpush1.msra.mxu0 0.0
  %114 = vmatprep.subr.mxu0 0.0
  %115 = vmatpush1.msra.mxu0 0.0
  %116 = vmatprep.subr.mxu0 0.0
  %117 = vmatpush1.msra.mxu0 0.0
  %118 = vmatprep.subr.mxu0 0.0
  %119 = vmatpush1.msra.mxu0 0.0
  %120 = vmatprep.subr.mxu0 0.0
  %121 = vmatpush1.msra.mxu0 0.0
  %122 = vmatprep.mubr.f32.mxu0 0.0
  %123 = vmatmul.mubr.f32.gmra.mrb[0].mxu0 %v53
  %v124 = vpop.f32.mrb[0].mxu0
  %v125 = vadd.f32 %v44, %v124
  %v126 = vpop.f32.mrb[0].mxu0
  %127 = vmatprep.mubr.f32.mxu0 0.0
  %128 = vmatmul.mubr.f32.gmra.mrb[0].mxu0 %v56
  %v129 = vpop.f32.mrb[0].mxu0
  %v130 = vadd.f32 %v49, %v129
  %v131 = vpop.f32.mrb[0].mxu0
  %132 = vdwg.mxu0
  %v133 = vtanh.pop %v125
  %v134 = vtanh.pop %v130
  %v135 = vld [vmem:[%s3] sm:$0xff]
  %v136 = vld [vmem:[%s3 + $0x8] sm:$0xff]
  %v137 = vld [vmem:[%s4] sm:$0xff]
  %v138 = vld [vmem:[%s4 + $0x8] sm:$0xff]
  %140 = vset.pattern.permute.xlu0 0
  %141 = vperm.xlu0 %140, %v137
  %v142 = vpop.permute.xlu0 %141
  %145 = vset.pattern.permute.xlu0 0
  %146 = vperm.xlu0 %145, %v138
  %v147 = vpop.permute.xlu0 %146
  %vm149 = vcmask 130048
  %v151 = vsel %vm149, %v135, 0
  %v154 = vsel %vm149, %v136, 0
  %156 = vmatprep.subr.mxu0 0.0
  %157 = vmatpush1.msra.mxu0 %v133
  %158 = vmatprep.subr.mxu0 0.0
  %159 = vmatpush1.msra.mxu0 %v134
  %160 = vmatprep.subr.mxu0 0.0
  %161 = vmatpush1.msra.mxu0 0.0
  %162 = vmatprep.subr.mxu0 0.0
  %163 = vmatpush1.msra.mxu0 0.0
  %164 = vmatprep.subr.mxu0 0.0
  %165 = vmatpush1.msra.mxu0 0.0
  %166 = vmatprep.subr.mxu0 0.0
  %167 = vmatpush1.msra.mxu0 0.0
  %168 = vmatprep.subr.mxu0 0.0
  %169 = vmatpush1.msra.mxu0 0.0
  %170 = vmatprep.subr.mxu0 0.0
  %171 = vmatpush1.msra.mxu0 0.0
  %172 = vmatprep.subr.mxu0 0.0
  %173 = vmatpush1.msra.mxu0 0.0
  %174 = vmatprep.subr.mxu0 0.0
  %175 = vmatpush1.msra.mxu0 0.0
  %176 = vmatprep.subr.mxu0 0.0
  %177 = vmatpush1.msra.mxu0 0.0
  %178 = vmatprep.subr.mxu0 0.0
  %179 = vmatpush1.msra.mxu0 0.0
  %180 = vmatprep.subr.mxu0 0.0
  %181 = vmatpush1.msra.mxu0 0.0
  %182 = vmatprep.subr.mxu0 0.0
  %183 = vmatpush1.msra.mxu0 0.0
  %184 = vmatprep.subr.mxu0 0.0
  %185 = vmatpush1.msra.mxu0 0.0
  %186 = vmatprep.subr.mxu0 0.0
  %187 = vmatpush1.msra.mxu0 0.0
  %188 = vmatprep.subr.mxu0 0.0
  %189 = vmatpush1.msra.mxu0 0.0
  %190 = vmatprep.subr.mxu0 0.0
  %191 = vmatpush1.msra.mxu0 0.0
  %192 = vmatprep.subr.mxu0 0.0
  %193 = vmatpush1.msra.mxu0 0.0
  %194 = vmatprep.subr.mxu0 0.0
  %195 = vmatpush1.msra.mxu0 0.0
  %196 = vmatprep.subr.mxu0 0.0
  %197 = vmatpush1.msra.mxu0 0.0
  %198 = vmatprep.subr.mxu0 0.0
  %199 = vmatpush1.msra.mxu0 0.0
  %200 = vmatprep.subr.mxu0 0.0
  %201 = vmatpush1.msra.mxu0 0.0
  %202 = vmatprep.subr.mxu0 0.0
  %203 = vmatpush1.msra.mxu0 0.0
  %204 = vmatprep.subr.mxu0 0.0
  %205 = vmatpush1.msra.mxu0 0.0
  %206 = vmatprep.subr.mxu0 0.0
  %207 = vmatpush1.msra.mxu0 0.0
  %208 = vmatprep.subr.mxu0 0.0
  %209 = vmatpush1.msra.mxu0 0.0
  %210 = vmatprep.subr.mxu0 0.0
  %211 = vmatpush1.msra.mxu0 0.0
  %212 = vmatprep.subr.mxu0 0.0
  %213 = vmatpush1.msra.mxu0 0.0
  %214 = vmatprep.subr.mxu0 0.0
  %215 = vmatpush1.msra.mxu0 0.0
  %216 = vmatprep.subr.mxu0 0.0
  %217 = vmatpush1.msra.mxu0 0.0
  %218 = vmatprep.subr.mxu0 0.0
  %219 = vmatpush1.msra.mxu0 0.0
  %220 = vmatprep.mubr.f32.mxu0 0.0
  %221 = vmatmul.mubr.f32.gmra.mrb[0].mxu0 %v151
  %v222 = vpop.f32.mrb[0].mxu0
  %v223 = vadd.f32 %v142, %v222
  %v224 = vpop.f32.mrb[0].mxu0
  %225 = vmatprep.mubr.f32.mxu0 0.0
  %226 = vmatmul.mubr.f32.gmra.mrb[0].mxu0 %v154
  %v227 = vpop.f32.mrb[0].mxu0
  %v228 = vadd.f32 %v147, %v227
  %v229 = vpop.f32.mrb[0].mxu0
  %230 = vdwg.mxu0
  %v231 = vtanh.pop %v223
  %v232 = vtanh.pop %v228
  %v233 = vld [vmem:[%s5] sm:$0xff]
  %v234 = vld [vmem:[%s6] sm:$0xff]
  %236 = vset.pattern.permute.xlu0 0
  %237 = vperm.xlu0 %236, %v234
  %v238 = vpop.permute.xlu0 %237
  %v241 = vsel %vm149, %v233, 0
  %243 = vmatprep.subr.mxu0 0.0
  %244 = vmatpush1.msra.mxu0 %v231
  %245 = vmatprep.subr.mxu0 0.0
  %246 = vmatpush1.msra.mxu0 %v232
  %247 = vmatprep.subr.mxu0 0.0
  %248 = vmatpush1.msra.mxu0 0.0
  %249 = vmatprep.subr.mxu0 0.0
  %250 = vmatpush1.msra.mxu0 0.0
  %251 = vmatprep.subr.mxu0 0.0
  %252 = vmatpush1.msra.mxu0 0.0
  %253 = vmatprep.subr.mxu0 0.0
  %254 = vmatpush1.msra.mxu0 0.0
  %255 = vmatprep.subr.mxu0 0.0
  %256 = vmatpush1.msra.mxu0 0.0
  %257 = vmatprep.subr.mxu0 0.0
  %258 = vmatpush1.msra.mxu0 0.0
  %259 = vmatprep.subr.mxu0 0.0
  %260 = vmatpush1.msra.mxu0 0.0
  %261 = vmatprep.subr.mxu0 0.0
  %262 = vmatpush1.msra.mxu0 0.0
  %263 = vmatprep.subr.mxu0 0.0
  %264 = vmatpush1.msra.mxu0 0.0
  %265 = vmatprep.subr.mxu0 0.0
  %266 = vmatpush1.msra.mxu0 0.0
  %267 = vmatprep.subr.mxu0 0.0
  %268 = vmatpush1.msra.mxu0 0.0
  %269 = vmatprep.subr.mxu0 0.0
  %270 = vmatpush1.msra.mxu0 0.0
  %271 = vmatprep.subr.mxu0 0.0
  %272 = vmatpush1.msra.mxu0 0.0
  %273 = vmatprep.subr.mxu0 0.0
  %274 = vmatpush1.msra.mxu0 0.0
  %275 = vmatprep.subr.mxu0 0.0
  %276 = vmatpush1.msra.mxu0 0.0
  %277 = vmatprep.subr.mxu0 0.0
  %278 = vmatpush1.msra.mxu0 0.0
  %279 = vmatprep.subr.mxu0 0.0
  %280 = vmatpush1.msra.mxu0 0.0
  %281 = vmatprep.subr.mxu0 0.0
  %282 = vmatpush1.msra.mxu0 0.0
  %283 = vmatprep.subr.mxu0 0.0
  %284 = vmatpush1.msra.mxu0 0.0
  %285 = vmatprep.subr.mxu0 0.0
  %286 = vmatpush1.msra.mxu0 0.0
  %287 = vmatprep.subr.mxu0 0.0
  %288 = vmatpush1.msra.mxu0 0.0
  %289 = vmatprep.subr.mxu0 0.0
  %290 = vmatpush1.msra.mxu0 0.0
  %291 = vmatprep.subr.mxu0 0.0
  %292 = vmatpush1.msra.mxu0 0.0
  %293 = vmatprep.subr.mxu0 0.0
  %294 = vmatpush1.msra.mxu0 0.0
  %295 = vmatprep.subr.mxu0 0.0
  %296 = vmatpush1.msra.mxu0 0.0
  %297 = vmatprep.subr.mxu0 0.0
  %298 = vmatpush1.msra.mxu0 0.0
  %299 = vmatprep.subr.mxu0 0.0
  %300 = vmatpush1.msra.mxu0 0.0
  %301 = vmatprep.subr.mxu0 0.0
  %302 = vmatpush1.msra.mxu0 0.0
  %303 = vmatprep.subr.mxu0 0.0
  %304 = vmatpush1.msra.mxu0 0.0
  %305 = vmatprep.subr.mxu0 0.0
  %306 = vmatpush1.msra.mxu0 0.0
  %307 = vmatprep.mubr.f32.mxu0 0.0
  %308 = vmatmul.mubr.f32.gmra.mrb[0].mxu0 %v241
  %v309 = vpop.f32.mrb[0].mxu0
  %v310 = vadd.f32 %v238, %v309
  %v311 = vpop.f32.mrb[0].mxu0
  %312 = vdwg.mxu0
  %v313 = vtanh.pop %v310
  %v314 = vld [vmem:[%s7] sm:$0xff]
  %316 = vset.pattern.permute.xlu0 0
  %317 = vperm.xlu0 %316, %v314
  %v318 = vpop.permute.xlu0 %317
  %v320 = vmul.f32 %v313, %v318
  %v321 = vrot.slane %v320, 4
  %v322 = vadd.f32 %v320, %v321
  %v323 = vrot.slane %v322, 2
  %v324 = vadd.f32 %v322, %v323
  %v325 = vrot.slane %v324, 1
  %v326 = vadd.f32 %v324, %v325
  %v327 = vld [vmem:[%s8] sm:$0xf]
  %329 = vset.pattern.permute.xlu0 0
  %330 = vperm.xlu0 %329, %v327
  %v331 = vpop.permute.xlu0 %330
  %v333 = vmul.f32 %v36, %v331
  %vm334 = vcmask 1043456
  %v335 = vsel %vm334, %v333, 0.0
  %v336 = vrot.slane %v335, 4
  %v337 = vadd.f32 %v335, %v336
  %v338 = vrot.slane %v337, 2
  %v339 = vadd.f32 %v337, %v338
  %v340 = vrot.slane %v339, 1
  %v341 = vadd.f32 %v339, %v340
  %v342 = vadd.f32 %v326, %v341
  %343 = vst [vmem:[%s9] sm:$0x1] %v342
  // Predicated region
  $region38: #{masked_net_forward.1} parent=0 // pred_check
    _
  $region39: #{masked_net_forward.1} parent=0 // pred_check_branch
    %345 = sbr.rel (0) target = $region41
  $region40: #{masked_net_forward.1} parent=0 // pred_region
    _
  $region41: #{masked_net_forward.1} parent=0 // pred_fallthru
    _
  // Predicated region
  $region42: #{masked_net_forward.1} parent=0 // pred_check
    _
  $region43: #{masked_net_forward.1} parent=0 // pred_check_branch
    %347 = sbr.rel (0) target = $region45
  $region44: #{masked_net_forward.1} parent=0 // pred_region
    _
  $region45: #{masked_net_forward.1} parent=0 // pred_fallthru
    _

</llo_original>
